<compile_context>
chip_gen: v7x
topology: tpu7x:2x2x1
jax: 0.10.0
libtpu: 0.0.40
codegen_flags: <defaults>
</compile_context>

<pallas_src>
import math
import functools

import jax
import jax.numpy as jnp
from jax.experimental import pallas as pl
from jax.experimental.pallas import tpu as pltpu


# Finite "minus infinity" for the running-max init: keeps alpha = exp(m_prev -
# m_new) well defined even when a tile row is fully causally masked.
_M_INIT = -1.0e30

_MIB = 1024 * 1024


# ----------------------------------------------------------------------------
# helpers
# ----------------------------------------------------------------------------
def _pick_tile(dim, candidates):
    """Largest candidate tile that evenly divides `dim`, else the full dim."""
    for c in candidates:
        if dim % c == 0 and dim >= c:
            return c
    return dim


def _clamp_vmem_limit(estimate_bytes):
    """Scoped-VMEM limit: cover the working set, never exceed 48 MiB (v7x-safe)."""
    return int(min(max(2 * estimate_bytes, 32 * _MIB), 48 * _MIB))


# ----------------------------------------------------------------------------
# tiled matmul + bias  (QKV projection and output projection)
# ----------------------------------------------------------------------------
def _matmul_bias_kernel(x_ref, w_ref, b_ref, o_ref, acc_ref):
    k = pl.program_id(2)

    @pl.when(k == 0)
    def _():
        acc_ref[...] = jnp.zeros_like(acc_ref)

    # native-dtype operands, f32 accumulation on the MXU
    acc_ref[...] += jnp.dot(x_ref[...], w_ref[...],
                            preferred_element_type=jnp.float32)

    @pl.when(k == pl.num_programs(2) - 1)
    def _():
        # bias added once, in the epilogue only
        o_ref[...] = (acc_ref[...] + b_ref[...].astype(jnp.float32)
                      ).astype(o_ref.dtype)


def _matmul_bias(x, w, b):
    """x: (M, K), w: (K, N), b: (N,) -> (M, N) = x @ w + b."""
    M, K = x.shape
    K2, N = w.shape
    assert K == K2
    b2 = b.reshape(1, N)

    # TODO(synk): pad M (= B*T) to a tile multiple instead of falling back to a
    # single whole-M block when B*T is not divisible by the candidates.
    tm = _pick_tile(M, (512, 256, 128))           # sublane (MXU M) tiles
    tn = _pick_tile(N, (1024, 512, 256, 128))     # lane-dense output tiles
    tk = _pick_tile(K, (1024, 512, 256, 128))     # contraction tiles
    assert M % tm == 0 and N % tn == 0 and K % tk == 0

    grid = (M // tm, N // tn, K // tk)
    itemsize = jnp.dtype(x.dtype).itemsize

    # double-buffered x/w/out tiles + bias + f32 accumulator
    est = 2 * (tm * tk + tk * tn + tm * tn + tn) * itemsize + tm * tn * 4
    vmem_limit = _clamp_vmem_limit(est)

    return pl.pallas_call(
        _matmul_bias_kernel,
        out_shape=jax.ShapeDtypeStruct((M, N), x.dtype),
        grid_spec=pltpu.PrefetchScalarGridSpec(
            num_scalar_prefetch=0,
            grid=grid,
            in_specs=[
                pl.BlockSpec((tm, tk), lambda i, j, k: (i, k)),   # x
                pl.BlockSpec((tk, tn), lambda i, j, k: (k, j)),   # w (tiled)
                pl.BlockSpec((1, tn), lambda i, j, k: (0, j)),    # bias
            ],
            out_specs=pl.BlockSpec((tm, tn), lambda i, j, k: (i, j)),
            scratch_shapes=[pltpu.VMEM((tm, tn), jnp.float32)],
        ),
        compiler_params=pltpu.CompilerParams(
            dimension_semantics=("parallel", "parallel", "arbitrary"),
            vmem_limit_bytes=vmem_limit),
        cost_estimate=pl.CostEstimate(
            flops=2 * M * N * K,
            transcendentals=0,
            bytes_accessed=int((M * K + K * N + N + M * N) * itemsize)),
    )(x, w, b2)


# ----------------------------------------------------------------------------
# flash attention (online softmax, causal)
# ----------------------------------------------------------------------------
def _flash_kernel(q_ref, k_ref, v_ref, o_ref, m_sc, l_sc, acc_sc,
                  *, scale, block_q, block_k):
    # q_ref: (1, 1, block_q, D); k_ref / v_ref: (1, 1, block_k, D)
    qi = pl.program_id(2)
    ki = pl.program_id(3)

    @pl.when(ki == 0)
    def _():
        m_sc[...] = jnp.full_like(m_sc, _M_INIT)     # finite init (NaN guard)
        l_sc[...] = jnp.zeros_like(l_sc)
        acc_sc[...] = jnp.zeros_like(acc_sc)

    def _update(apply_mask):
        # fold the softmax scale into q: block_q x D multiply, once per step
        q = q_ref[0, 0] * scale                      # (block_q, D), native dtype
        k = k_ref[0, 0]                              # (block_k, D)
        v = v_ref[0, 0]                              # (block_k, D)

        # per-head 2-D score matmul contracting D (no in-kernel transpose),
        # f32 accumulation on the MXU.
        s = jax.lax.dot_general(
            q, k, (((1,), (1,)), ((), ())),
            preferred_element_type=jnp.float32)      # (block_q, block_k)

        if apply_mask:                               # static: diagonal-band tiles only
            row = qi * block_q + jax.lax.broadcasted_iota(jnp.int32, s.shape, 0)
            col = ki * block_k + jax.lax.broadcasted_iota(jnp.int32, s.shape, 1)
            s = jnp.where(col <= row, s, -jnp.inf)

        # online softmax update (all f32 on the VPU / EUP)
        m_prev = m_sc[...]                                        # (block_q, 1)
        m_new = jnp.maximum(m_prev, jnp.max(s, axis=-1, keepdims=True))
        alpha = jnp.exp(m_prev - m_new)
        p = jnp.exp(s - m_new)                                    # (block_q, block_k)
        l_sc[...] = alpha * l_sc[...] + jnp.sum(p, axis=-1, keepdims=True)
        acc_sc[...] = alpha * acc_sc[...] + jnp.dot(
            p.astype(v.dtype), v, preferred_element_type=jnp.float32)
        m_sc[...] = m_new

    # Tile classification from static tile sizes + grid position:
    #   interior: entirely below the diagonal -> no mask work at all
    #   band    : intersects the diagonal     -> build the causal mask
    #   (else)  : entirely above the diagonal -> skipped (and its K/V DMA is
    #             elided by the clamped index_map in the wrapper)
    interior = ki * block_k + (block_k - 1) <= qi * block_q
    band = jnp.logical_and(ki * block_k <= qi * block_q + (block_q - 1),
                           jnp.logical_not(interior))

    @pl.when(interior)
    def _():
        _update(apply_mask=False)

    @pl.when(band)
    def _():
        _update(apply_mask=True)

    @pl.when(ki == pl.num_programs(3) - 1)
    def _():
        inv_l = pl.reciprocal(l_sc[...], approx=True)             # EUP, per row
        o_ref[0, 0] = (acc_sc[...] * inv_l).astype(o_ref.dtype)


def _flash_attention(q, k, v):
    """q, k, v: (B, H, T, D) -> (B, H, T, D) causal attention output."""
    B, H, T, D = q.shape
    block_q = _pick_tile(T, (1024, 512, 256, 128))
    block_k = _pick_tile(T, (512, 256, 128))
    # block_k <= block_q holds by construction (superset candidates / same
    # fallback); fully-masked rows are additionally handled by the finite m
    # init, so this is belt-and-braces.
    assert block_k <= block_q
    assert T % block_q == 0 and T % block_k == 0

    scale = 1.0 / math.sqrt(D)
    grid = (B, H, T // block_q, T // block_k)
    itemsize = jnp.dtype(q.dtype).itemsize

    # Clamp K/V tile index to the last causally-valid tile: for fully masked
    # (skipped) steps the block index repeats and Pallas elides the DMA.
    def _kv_index_map(b, h, qi, ki):
        last_valid = (qi * block_q + (block_q - 1)) // block_k
        return (b, h, jnp.minimum(ki, last_valid), 0)

    # double-buffered q/k/v/o tiles + scratch + in-kernel s/p temporaries
    est = (2 * (2 * block_q * D + 2 * block_k * D) * itemsize
           + (block_q * D + 2 * block_q) * 4
           + 2 * block_q * block_k * 4)
    vmem_limit = _clamp_vmem_limit(est)

    n_q_tiles = T // block_q
    kv_stream_factor = max(1, (n_q_tiles + 1) // 2)   # causal clamp ~halves re-reads

    kernel = functools.partial(_flash_kernel, scale=scale,
                               block_q=block_q, block_k=block_k)
    return pl.pallas_call(
        kernel,
        out_shape=jax.ShapeDtypeStruct((B, H, T, D), q.dtype),
        grid_spec=pltpu.PrefetchScalarGridSpec(
            num_scalar_prefetch=0,
            grid=grid,
            in_specs=[
                pl.BlockSpec((1, 1, block_q, D),
                             lambda b, h, qi, ki: (b, h, qi, 0)),   # q
                pl.BlockSpec((1, 1, block_k, D), _kv_index_map),    # k (clamped)
                pl.BlockSpec((1, 1, block_k, D), _kv_index_map),    # v (clamped)
            ],
            out_specs=pl.BlockSpec((1, 1, block_q, D),
                                   lambda b, h, qi, ki: (b, h, qi, 0)),
            scratch_shapes=[
                pltpu.VMEM((block_q, 1), jnp.float32),   # m (running max)
                pltpu.VMEM((block_q, 1), jnp.float32),   # l (running denom)
                pltpu.VMEM((block_q, D), jnp.float32),   # acc (unnormalized out)
            ],
        ),
        # (B, H, Tq) parallel axes shard across the 2 TCs on v7x; KV axis is
        # the sequential reduction.
        compiler_params=pltpu.CompilerParams(
            dimension_semantics=("parallel", "parallel", "parallel",
                                 "arbitrary"),
            vmem_limit_bytes=vmem_limit),
        cost_estimate=pl.CostEstimate(
            flops=int(2 * B * H * T * T * D),                 # causal ~halves 4BHT^2D
            transcendentals=int(B * H * T * T // 2),
            bytes_accessed=int(
                2 * B * H * T * D * itemsize                  # Q read + O write
                + 2 * B * H * T * D * itemsize * kv_stream_factor)),  # K/V streams
    )(q, k, v)


# ----------------------------------------------------------------------------
# public entry point: full CausalSelfAttention forward
# ----------------------------------------------------------------------------
def causal_self_attention(x, w_attn, b_attn, w_proj, b_proj, n_head):
    """x: (B, T, C); w_attn: (C, 3C); b_attn: (3C,); w_proj: (C, C); b_proj: (C,)."""
    B, T, C = x.shape
    H = n_head
    assert C % H == 0
    D = C // H

    # QKV projection (tiled matmul kernel)
    qkv = _matmul_bias(x.reshape(B * T, C), w_attn, b_attn)     # (B*T, 3C)

    # head split (wrapper-side layout plumbing).
    # TODO(synk): fold these transposes into the Pallas kernels via
    # layout-aware BlockSpecs; the (8,128) block-shape rule prevents clean
    # per-head D-column slicing when D < 128, so they stay in the wrapper.
    qkv = qkv.reshape(B, T, 3, H, D)
    q = jnp.transpose(qkv[:, :, 0], (0, 2, 1, 3))               # (B, H, T, D)
    k = jnp.transpose(qkv[:, :, 1], (0, 2, 1, 3))
    v = jnp.transpose(qkv[:, :, 2], (0, 2, 1, 3))

    # Harden the tile fallback: for long, non-128-divisible T pad the sequence
    # to a multiple of 128 so the flash tiles never collapse to one whole-T
    # block (VMEM cliff).  Causality makes padded keys inert; padded query
    # rows are sliced off below.
    Tp = T
    if T > 512 and T % 128 != 0:
        Tp = ((T + 127) // 128) * 128
        pad = ((0, 0), (0, 0), (0, Tp - T), (0, 0))
        q = jnp.pad(q, pad)
        k = jnp.pad(k, pad)
        v = jnp.pad(v, pad)

    # causal flash attention
    y = _flash_attention(q, k, v)                               # (B, H, Tp, D)
    if Tp != T:
        y = y[:, :, :T, :]

    # merge heads and output projection (tiled matmul kernel)
    y = jnp.transpose(y, (0, 2, 1, 3)).reshape(B * T, C)
    out = _matmul_bias(y, w_proj, b_proj)                       # (B*T, C)
    return out.reshape(B, T, C)


# ----------------------------------------------------------------------------
# pure-JAX reference mirroring the PyTorch forward
# ----------------------------------------------------------------------------
def _reference(x, w_attn, b_attn, w_proj, b_proj, n_head):
    B, T, C = x.shape
    H = n_head
    D = C // H
    qkv = x @ w_attn + b_attn                               # (B, T, 3C)
    q, k, v = jnp.split(qkv, 3, axis=-1)
    q = q.reshape(B, T, H, D).transpose(0, 2, 1, 3)         # (B, H, T, D)
    k = k.reshape(B, T, H, D).transpose(0, 2, 1, 3)
    v = v.reshape(B, T, H, D).transpose(0, 2, 1, 3)
    att = (q @ jnp.swapaxes(k, -2, -1)) * (1.0 / math.sqrt(D))
    mask = jnp.tril(jnp.ones((T, T), dtype=bool))
    att = jnp.where(mask[None, None], att, -jnp.inf)
    att = jax.nn.softmax(att, axis=-1)
    y = att @ v                                             # (B, H, T, D)
    y = y.transpose(0, 2, 1, 3).reshape(B, T, C)
    return y @ w_proj + b_proj


if __name__ == "__main__":
    # Small config consistent with the module: B=2, T=8 (== block_size), C=32, n_head=4
    B, T, C, n_head = 2, 8, 32, 4

    key = jax.random.PRNGKey(0)
    kx, k1, k2, k3, k4 = jax.random.split(key, 5)

    bound = 1.0 / math.sqrt(C)
    w_attn = jax.random.uniform(k1, (C, 3 * C), jnp.float32, -bound, bound)
    b_attn = jax.random.uniform(k2, (3 * C,), jnp.float32, -bound, bound)
    w_proj = jax.random.uniform(k3, (C, C), jnp.float32, -bound, bound)
    b_proj = jax.random.uniform(k4, (C,), jnp.float32, -bound, bound)

    x = jax.random.normal(kx, (B, T, C), jnp.float32)

    out = causal_self_attention(x, w_attn, b_attn, w_proj, b_proj, n_head)
    out = jax.block_until_ready(out)

    ref = _reference(x, w_attn, b_attn, w_proj, b_proj, n_head)
    assert out.shape == (B, T, C)
    # tolerance loosened slightly: pl.reciprocal(approx=True) has ~2^-12 rel error
    assert jnp.allclose(out, ref, atol=2e-3, rtol=2e-3), "mismatch vs reference"

    print("KERNEL_OK")
</pallas_src>

<mosaic_0001>
module attributes {stable_mosaic.version = 11 : i64} {
  func.func @_matmul_bias_kernel(%arg0: i32, %arg1: i32, %arg2: i32, %arg3: memref<16x32xf32, #tpu.memory_space<vmem>>, %arg4: memref<32x96xf32, #tpu.memory_space<vmem>>, %arg5: memref<1x96xf32, #tpu.memory_space<vmem>>, %arg6: memref<16x96xf32, #tpu.memory_space<vmem>>, %arg7: memref<16x96xf32, #tpu.memory_space<vmem>>) attributes {dimension_semantics = [#tpu.dimension_semantics<parallel>, #tpu.dimension_semantics<parallel>, #tpu.dimension_semantics<arbitrary>], iteration_bounds = array<i64: 1, 1, 1>, scalar_prefetch = 0 : i64, scratch_operands = 1 : i64, tpu.core_type = #tpu.core_type<tc>, window_params = [{transform_indices = @transform_0, window_bounds = array<i64: 16, 32>}, {transform_indices = @transform_1, window_bounds = array<i64: 32, 96>}, {transform_indices = @transform_2, window_bounds = array<i64: 1, 96>}, {transform_indices = @transform_3, window_bounds = array<i64: 16, 96>}]} {
    %c0_i32 = arith.constant 0 : i32
    %0 = arith.cmpi eq, %arg2, %c0_i32 : i32
    %1 = arith.extui %0 : i1 to i32
    %c0_i32_0 = arith.constant 0 : i32
    %2 = arith.cmpi ne, %1, %c0_i32_0 : i32
    scf.if %2 {
      %cst_10 = arith.constant 0.000000e+00 : f32
      %12 = vector.broadcast %cst_10 : f32 to vector<16x96xf32>
      %c0_11 = arith.constant 0 : index
      %c0_12 = arith.constant 0 : index
      %13 = vector.load %arg7[%c0_11, %c0_12] : memref<16x96xf32, #tpu.memory_space<vmem>>, vector<16x96xf32>
      tpu.vector_store %arg7[%c0_11, %c0_12], %12 {strides = array<i32>} : memref<16x96xf32, #tpu.memory_space<vmem>>, vector<16x96xf32>,
    } else {
    }
    %c0 = arith.constant 0 : index
    %c0_1 = arith.constant 0 : index
    %3 = vector.load %arg7[%c0, %c0_1] : memref<16x96xf32, #tpu.memory_space<vmem>>, vector<16x96xf32>
    %c0_2 = arith.constant 0 : index
    %c0_3 = arith.constant 0 : index
    %4 = vector.load %arg3[%c0_2, %c0_3] : memref<16x32xf32, #tpu.memory_space<vmem>>, vector<16x32xf32>
    %c0_4 = arith.constant 0 : index
    %c0_5 = arith.constant 0 : index
    %5 = vector.load %arg4[%c0_4, %c0_5] : memref<32x96xf32, #tpu.memory_space<vmem>>, vector<32x96xf32>
    %cst = arith.constant dense<0.000000e+00> : vector<16x96xf32>
    %6 = tpu.matmul %4, %5, %cst {dimension_numbers = #tpu.dot_dimension_numbers<[1], [0], [0], [1], [0, 0, 1, 1], [], []>} : vector<16x32xf32>, vector<32x96xf32>, vector<16x96xf32> -> vector<16x96xf32>
    %7 = arith.addf %3, %6 : vector<16x96xf32>
    %c0_6 = arith.constant 0 : index
    %c0_7 = arith.constant 0 : index
    %8 = vector.load %arg7[%c0_6, %c0_7] : memref<16x96xf32, #tpu.memory_space<vmem>>, vector<16x96xf32>
    tpu.vector_store %arg7[%c0_6, %c0_7], %7 {strides = array<i32>} : memref<16x96xf32, #tpu.memory_space<vmem>>, vector<16x96xf32>,
    %c0_i32_8 = arith.constant 0 : i32
    %9 = arith.cmpi eq, %arg2, %c0_i32_8 : i32
    %10 = arith.extui %9 : i1 to i32
    %c0_i32_9 = arith.constant 0 : i32
    %11 = arith.cmpi ne, %10, %c0_i32_9 : i32
    scf.if %11 {
      %c0_10 = arith.constant 0 : index
      %c0_11 = arith.constant 0 : index
      %12 = vector.load %arg7[%c0_10, %c0_11] : memref<16x96xf32, #tpu.memory_space<vmem>>, vector<16x96xf32>
      %c0_12 = arith.constant 0 : index
      %c0_13 = arith.constant 0 : index
      %13 = vector.load %arg5[%c0_12, %c0_13] : memref<1x96xf32, #tpu.memory_space<vmem>>, vector<1x96xf32>
      %14 = vector.broadcast %13 : vector<1x96xf32> to vector<16x96xf32>
      %15 = arith.addf %12, %14 : vector<16x96xf32>
      %c0_14 = arith.constant 0 : index
      %c0_15 = arith.constant 0 : index
      %16 = vector.load %arg6[%c0_14, %c0_15] : memref<16x96xf32, #tpu.memory_space<vmem>>, vector<16x96xf32>
      tpu.vector_store %arg6[%c0_14, %c0_15], %15 {strides = array<i32>} : memref<16x96xf32, #tpu.memory_space<vmem>>, vector<16x96xf32>,
    } else {
    }
    return
  }
  func.func @transform_0(%arg0: i32, %arg1: i32, %arg2: i32) -> (i32, i32) {
    %c0_i32 = arith.constant 0 : i32
    return %arg0, %arg2 : i32, i32
  }
  func.func @transform_1(%arg0: i32, %arg1: i32, %arg2: i32) -> (i32, i32) {
    %c0_i32 = arith.constant 0 : i32
    return %arg2, %arg1 : i32, i32
  }
  func.func @transform_2(%arg0: i32, %arg1: i32, %arg2: i32) -> (i32, i32) {
    %c0_i32 = arith.constant 0 : i32
    %c0_i32_0 = arith.constant 0 : i32
    return %c0_i32, %arg1 : i32, i32
  }
  func.func @transform_3(%arg0: i32, %arg1: i32, %arg2: i32) -> (i32, i32) {
    %c0_i32 = arith.constant 0 : i32
    return %arg0, %arg1 : i32, i32
  }
}

</mosaic_0001>

<llo_original>
// kernel: tpu_custom_call.1
$region0: #{tpu_custom_call.1}
  #allocation0 [shape = 'u32[]', space=smem, size = 0x4, offset = 0x4, fixed_abs, tag = 'smem constant byte address 0x4 - core index']
  #allocation1 [shape = 'u32[144,128]{1,0:T(1,128)}', space=vmem, size = 0x12000, scoped, tag = 'internal scratch']
  #allocation2 [shape = 'f32[16,96]{1,0:T(8,128)}', space=vmem, size = 0x2000, scoped, tag = 'scratch operand']
  %s0 = inlined_call_operand.hbm [shape: f32[16,32], index: 0, kind: input, shape index: {}]
  %s1 = inlined_call_operand.hbm [shape: f32[32,96], index: 1, kind: input, shape index: {}]
  %s2 = inlined_call_operand.vmem [shape: f32[1,96], index: 2, kind: input, shape index: {}]
  %s3 = inlined_call_operand.hbm [shape: f32[16,96], index: 3, kind: output, shape index: {}]
  %s4 = sld [smem:[#allocation0]]
  $region38: #{tpu_custom_call.1} parent=0
    _
  %s6 = ssub.s32 1, %s4
  %s7 = scalar_select 0, %s6, %s4
  $region1: #{tpu_custom_call.1} parent=0
    #allocation3 [shape = 'u8[8192]{0}', space=vmem, size = 0x2000, scoped, tag = 'input window, operand 0, single buffered']
    #allocation4 [shape = 's32[1]{0}', space=sflag, size = 0x4, scoped, tag = 'scoped memory for tpu_custom_call.1']
    #allocation5 [shape = 's32[1]{0}', space=sflag, size = 0x4, scoped, tag = 'scoped memory for tpu_custom_call.1']
    #allocation6 [shape = 'u8[16384]{0}', space=vmem, size = 0x4000, scoped, tag = 'input window, operand 1, single buffered']
    #allocation7 [shape = 's32[1]{0}', space=sflag, size = 0x4, scoped, tag = 'scoped memory for tpu_custom_call.1']
    #allocation8 [shape = 'u8[8192]{0}', space=vmem, size = 0x2000, scoped, tag = 'output window, operand 0, single buffered']
    %8 = vsyncpa [#allocation4], 0
    %9 = vsyncpa [#allocation7], 0
    %10 = vsyncpa [#allocation5], 0
    // Predicated region
    $region2: #{tpu_custom_call.1} parent=1 // pred_check
      _
    $region3: #{tpu_custom_call.1} parent=1 // pred_check_branch
      %12 = sbr.rel (0) target = $region5
    $region4: #{tpu_custom_call.1} parent=1 // pred_region
      %s14 = ssub.s32 256, 256
      %15 = vsyncadd [#allocation4], %s14
      %s16 = sshll.u32 [#allocation3], 4
      %s17 = int_to_ptr.vmem [resolvable:$true] %s16
      %22 = dma.hbm_to_vmem [thread:$0]  %s0, 256, %s17, [#allocation4], 128, 128, 8
    $region5: #{tpu_custom_call.1} parent=1 // pred_fallthru
      _
    // Predicated region
    $region6: #{tpu_custom_call.1} parent=1 // pred_check
      _
    $region7: #{tpu_custom_call.1} parent=1 // pred_check_branch
      %24 = sbr.rel (0) target = $region9
    $region8: #{tpu_custom_call.1} parent=1 // pred_region
      %s26 = ssub.s32 512, 512
      %27 = vsyncadd [#allocation7], %s26
      %s28 = sshll.u32 [#allocation6], 4
      %s29 = int_to_ptr.vmem [resolvable:$true] %s28
      %34 = dma.hbm_to_vmem [thread:$0]  %s1, 512, %s29, [#allocation7], 128, 128, 8
    $region9: #{tpu_custom_call.1} parent=1 // pred_fallthru
      _
    // Predicated region
    $region10: #{tpu_custom_call.1} parent=1 // pred_check
      _
    $region11: #{tpu_custom_call.1} parent=1 // pred_check_branch
      %36 = sbr.rel (0) target = $region13
    $region12: #{tpu_custom_call.1} parent=1 // pred_region
      _
    $region13: #{tpu_custom_call.1} parent=1 // pred_fallthru
      _
    // Predicated region
    $region14: #{tpu_custom_call.1} parent=1 // pred_check
      _
    $region15: #{tpu_custom_call.1} parent=1 // pred_check_branch
      %38 = sbr.rel (0) target = $region17
    $region16: #{tpu_custom_call.1} parent=1 // pred_region
      %39 = dma.done [#allocation4], 256
    $region17: #{tpu_custom_call.1} parent=1 // pred_fallthru
      _
    // Predicated region
    $region18: #{tpu_custom_call.1} parent=1 // pred_check
      _
    $region19: #{tpu_custom_call.1} parent=1 // pred_check_branch
      %41 = sbr.rel (0) target = $region21
    $region20: #{tpu_custom_call.1} parent=1 // pred_region
      %42 = dma.done [#allocation7], 512
    $region21: #{tpu_custom_call.1} parent=1 // pred_fallthru
      _
    %p43 = scmp.eq.s32.totalorder 0, 0
    // Predicated region
    $region22: #{tpu_custom_call.1} parent=1 // pred_check
      %p44 = pneg %p43
    $region23: #{tpu_custom_call.1} parent=1 // pred_check_branch
      %46 = sbr.rel (%p44) target = $region25
    $region24: #{tpu_custom_call.1} parent=1 // pred_region
      %vm47 = vcmask 785408
      %48 = vst.msk [vmem:[#allocation2] sm:$0xff] %vm47, 0.0
      %49 = vst.msk [vmem:[#allocation2 + $0x8] sm:$0xff] %vm47, 0.0
    $region25: #{tpu_custom_call.1} parent=1 // pred_fallthru
      _
    %v50 = vld [vmem:[#allocation2] sm:$0xff]
    %v51 = vld [vmem:[#allocation2 + $0x8] sm:$0xff]
    %v52 = vld [vmem:[#allocation3] sm:$0xff]
    %v53 = vld [vmem:[#allocation3 + $0x8] sm:$0xff]
    %v54 = vld [vmem:[#allocation6] sm:$0xff]
    %v55 = vld [vmem:[#allocation6 + $0x8] sm:$0xff]
    %v56 = vld [vmem:[#allocation6 + $0x10] sm:$0xff]
    %v57 = vld [vmem:[#allocation6 + $0x18] sm:$0xff]
    %vm58 = vcmask 261120
    %v60 = vsel %vm58, %v52, 0
    %v63 = vsel %vm58, %v53, 0
    %65 = vmatprep.subr.mxu0 0.0
    %66 = vmatpush1.msra.mxu0 %v54
    %67 = vmatprep.subr.mxu0 0.0
    %68 = vmatpush1.msra.mxu0 %v55
    %69 = vmatprep.subr.mxu0 0.0
    %70 = vmatpush1.msra.mxu0 %v56
    %71 = vmatprep.subr.mxu0 0.0
    %72 = vmatpush1.msra.mxu0 %v57
    %73 = vmatprep.subr.mxu0 0.0
    %74 = vmatpush1.msra.mxu0 0.0
    %75 = vmatprep.subr.mxu0 0.0
    %76 = vmatpush1.msra.mxu0 0.0
    %77 = vmatprep.subr.mxu0 0.0
    %78 = vmatpush1.msra.mxu0 0.0
    %79 = vmatprep.subr.mxu0 0.0
    %80 = vmatpush1.msra.mxu0 0.0
    %81 = vmatprep.subr.mxu0 0.0
    %82 = vmatpush1.msra.mxu0 0.0
    %83 = vmatprep.subr.mxu0 0.0
    %84 = vmatpush1.msra.mxu0 0.0
    %85 = vmatprep.subr.mxu0 0.0
    %86 = vmatpush1.msra.mxu0 0.0
    %87 = vmatprep.subr.mxu0 0.0
    %88 = vmatpush1.msra.mxu0 0.0
    %89 = vmatprep.subr.mxu0 0.0
    %90 = vmatpush1.msra.mxu0 0.0
    %91 = vmatprep.subr.mxu0 0.0
    %92 = vmatpush1.msra.mxu0 0.0
    %93 = vmatprep.subr.mxu0 0.0
    %94 = vmatpush1.msra.mxu0 0.0
    %95 = vmatprep.subr.mxu0 0.0
    %96 = vmatpush1.msra.mxu0 0.0
    %97 = vmatprep.subr.mxu0 0.0
    %98 = vmatpush1.msra.mxu0 0.0
    %99 = vmatprep.subr.mxu0 0.0
    %100 = vmatpush1.msra.mxu0 0.0
    %101 = vmatprep.subr.mxu0 0.0
    %102 = vmatpush1.msra.mxu0 0.0
    %103 = vmatprep.subr.mxu0 0.0
    %104 = vmatpush1.msra.mxu0 0.0
    %105 = vmatprep.subr.mxu0 0.0
    %106 = vmatpush1.msra.mxu0 0.0
    %107 = vmatprep.subr.mxu0 0.0
    %108 = vmatpush1.msra.mxu0 0.0
    %109 = vmatprep.subr.mxu0 0.0
    %110 = vmatpush1.msra.mxu0 0.0
    %111 = vmatprep.subr.mxu0 0.0
    %112 = vmatpush1.msra.mxu0 0.0
    %113 = vmatprep.subr.mxu0 0.0
    %114 = vmatpush1.msra.mxu0 0.0
    %115 = vmatprep.subr.mxu0 0.0
    %116 = vmatpush1.msra.mxu0 0.0
    %117 = vmatprep.subr.mxu0 0.0
    %118 = vmatpush1.msra.mxu0 0.0
    %119 = vmatprep.subr.mxu0 0.0
    %120 = vmatpush1.msra.mxu0 0.0
    %121 = vmatprep.subr.mxu0 0.0
    %122 = vmatpush1.msra.mxu0 0.0
    %123 = vmatprep.subr.mxu0 0.0
    %124 = vmatpush1.msra.mxu0 0.0
    %125 = vmatprep.subr.mxu0 0.0
    %126 = vmatpush1.msra.mxu0 0.0
    %127 = vmatprep.subr.mxu0 0.0
    %128 = vmatpush1.msra.mxu0 0.0
    %129 = vmatprep.mubr.f32.mxu0 0.0
    %130 = vmatmul.mubr.f32.gmra.mrb[0].mxu0 %v60
    %v131 = vpop.f32.mrb[0].mxu0
    %v132 = vadd.f32 0.0, %v131
    %v133 = vpop.f32.mrb[0].mxu0
    %134 = vmatprep.mubr.f32.mxu0 0.0
    %135 = vmatmul.mubr.f32.gmra.mrb[0].mxu0 %v63
    %v136 = vpop.f32.mrb[0].mxu0
    %v137 = vadd.f32 0.0, %v136
    %v138 = vpop.f32.mrb[0].mxu0
    %139 = vdwg.mxu0
    %v140 = vadd.f32 %v50, %v132
    %v141 = vadd.f32 %v51, %v137
    %vm142 = vcmask 785408
    %143 = vst.msk [vmem:[#allocation2] sm:$0xff] %vm142, %v140
    %144 = vst.msk [vmem:[#allocation2 + $0x8] sm:$0xff] %vm142, %v141
    // Predicated region
    $region26: #{tpu_custom_call.1} parent=1 // pred_check
      %p145 = pneg %p43
    $region27: #{tpu_custom_call.1} parent=1 // pred_check_branch
      %147 = sbr.rel (%p145) target = $region29
    $region28: #{tpu_custom_call.1} parent=1 // pred_region
      %v148 = vld [vmem:[#allocation2] sm:$0xff]
      %v149 = vld [vmem:[#allocation2 + $0x8] sm:$0xff]
      %v150 = vld [vmem:[%s2] sm:$0x1]
      %v152 = vlaneseq
      %v153 = vshrl.u32 %v152, 7
      %v154 = vsub.s32 0, %v153
      %v155 = vrot.slane %v150, %v154
      %v157 = vadd.f32 %v148, %v155
      %v158 = vadd.f32 %v149, %v155
      %159 = vst.msk [vmem:[#allocation8] sm:$0xff] %vm142, %v157
      %160 = vst.msk [vmem:[#allocation8 + $0x8] sm:$0xff] %vm142, %v158
    $region29: #{tpu_custom_call.1} parent=1 // pred_fallthru
      _
    // Predicated region
    $region30: #{tpu_custom_call.1} parent=1 // pred_check
      _
    $region31: #{tpu_custom_call.1} parent=1 // pred_check_branch
      %162 = sbr.rel (0) target = $region33
    $region32: #{tpu_custom_call.1} parent=1 // pred_region
      %s164 = ssub.s32 256, 256
      %165 = vsyncadd [#allocation5], %s164
      %s166 = sshll.u32 [#allocation8], 4
      %s167 = int_to_ptr.vmem [resolvable:$true] %s166
      %172 = dma.vmem_to_hbm [thread:$0]  %s167, 256, %s3, [#allocation5], 128, 128, 8
    $region33: #{tpu_custom_call.1} parent=1 // pred_fallthru
      _
    // Predicated region
    $region34: #{tpu_custom_call.1} parent=1 // pred_check
      _
    $region35: #{tpu_custom_call.1} parent=1 // pred_check_branch
      %174 = sbr.rel (0) target = $region37
    $region36: #{tpu_custom_call.1} parent=1 // pred_region
      %175 = dma.done [#allocation5], 256
    $region37: #{tpu_custom_call.1} parent=1 // pred_fallthru
      _
    %176 = vsyncpa [#allocation4], 1
    %177 = vsyncpa [#allocation7], 1
    %178 = vsyncpa [#allocation5], 1

</llo_original>
